<compile_context>
chip_gen: v7x
topology: tpu7x:2x2x1
jax: 0.10.0
libtpu: 0.0.40
codegen_flags: <defaults>
</compile_context>

<pallas_src>
from typing import NamedTuple

import jax
import jax.numpy as jnp
from jax.experimental import pallas as pl
from jax.experimental.pallas import tpu as pltpu

_HC = 128  # hidden-dim chunk width (lane width)


def _round_up(n, m):
    return ((n + m - 1) // m) * m


class QNetworkParams(NamedTuple):
    """Padded, pre-cast parameters (build once with prepare_params)."""
    w1: jax.Array  # (D_p, H_p)  bfloat16
    b1: jax.Array  # (1,  H_p)  float32
    w2: jax.Array  # (H_p, A_p) bfloat16
    b2: jax.Array  # (1,  A_p)  float32


def prepare_params(w1, b1, w2, b2):
    """Pad feature dims to lane multiples and cast MXU operands to bf16.

    w1: (D_in, H1), b1: (H1,) or (1, H1)
    w2: (H1, A),    b2: (A,)  or (1, A)
    Done ONCE at init so the per-call forward path does no weight traffic
    beyond the kernel's own (VMEM-resident) weight blocks.
    """
    D_in, H1 = w1.shape
    A = w2.shape[1]
    D_p = _round_up(D_in, 8)        # sublane only; block = full array dim
    H_p = _round_up(H1, _HC)
    A_p = _round_up(A, 128)

    w1_p = jnp.zeros((D_p, H_p), jnp.bfloat16).at[:D_in, :H1].set(
        w1.astype(jnp.bfloat16))
    b1_p = jnp.zeros((1, H_p), jnp.float32).at[:, :H1].set(
        b1.reshape(1, H1).astype(jnp.float32))
    w2_p = jnp.zeros((H_p, A_p), jnp.bfloat16).at[:H1, :A].set(
        w2.astype(jnp.bfloat16))
    b2_p = jnp.zeros((1, A_p), jnp.float32).at[:, :A].set(
        b2.reshape(1, A).astype(jnp.float32))
    return QNetworkParams(w1_p, b1_p, w2_p, b2_p)


def _make_kernel(n_chunks):
    def kernel(x_ref, w1_ref, b1_ref, w2_ref, b2_ref, o_ref):
        x = x_ref[...]                                   # (TB, D_p) bf16
        acc = jnp.zeros(o_ref.shape, jnp.float32)        # (TB, A_p) f32
        for c in range(n_chunks):                        # static, unrolled
            lo = c * _HC
            # Layer 1 chunk: f32 accumulation, f32 bias + ReLU.
            h = jnp.dot(x, w1_ref[:, pl.ds(lo, _HC)],
                        preferred_element_type=jnp.float32)
            h = jnp.maximum(h + b1_ref[:, pl.ds(lo, _HC)], 0.0)
            # Layer 2 partial: bf16 MXU pass, accumulate in f32.
            acc = acc + jnp.dot(h.astype(jnp.bfloat16),
                                w2_ref[pl.ds(lo, _HC), :],
                                preferred_element_type=jnp.float32)
        o_ref[...] = jnp.maximum(acc + b2_ref[...], 0.0).astype(o_ref.dtype)
    return kernel


def _pick_batch_tiling(B):
    """Pick (TB, B_p): big tiles to amortize grid-step overhead, but keep
    grid >= 2 once the padded batch reaches 256 so v7x's two TCs both work."""
    B8 = _round_up(max(B, 1), 8)
    if B8 < 256:
        return B8, B8                       # single step for small batches
    tb = min(512, max(128, (B8 // 2) // 128 * 128))
    return tb, _round_up(B8, tb)


def qnetwork_forward(x, params: QNetworkParams, action_size: int):
    """Forward pass: relu(relu(x @ W1 + b1) @ W2 + b2).

    x:      (B, D_in) float32
    params: output of prepare_params (padded / bf16)
    Returns (B, action_size) float32.
    """
    B, D_in = x.shape
    D_p, H_p = params.w1.shape
    A_p = params.w2.shape[1]
    n_chunks = H_p // _HC

    TB, B_p = _pick_batch_tiling(B)

    # Single fused pad of the (bf16-cast) activations; exact (zeros).
    x_p = jnp.pad(x.astype(jnp.bfloat16), ((0, B_p - B), (0, D_p - D_in)))

    out = pl.pallas_call(
        _make_kernel(n_chunks),
        out_shape=jax.ShapeDtypeStruct((B_p, A_p), jnp.float32),
        grid_spec=pltpu.PrefetchScalarGridSpec(
            num_scalar_prefetch=0,
            grid=(B_p // TB,),
            in_specs=[
                # x: tiled along the batch; params: constant index maps so
                # they stay resident in VMEM across batch tiles.
                pl.BlockSpec((TB, D_p), lambda i: (i, 0)),
                pl.BlockSpec((D_p, H_p), lambda i: (0, 0)),
                pl.BlockSpec((1, H_p), lambda i: (0, 0)),
                pl.BlockSpec((H_p, A_p), lambda i: (0, 0)),
                pl.BlockSpec((1, A_p), lambda i: (0, 0)),
            ],
            out_specs=pl.BlockSpec((TB, A_p), lambda i: (i, 0)),
        ),
        compiler_params=pltpu.CompilerParams(
            dimension_semantics=("parallel",),
        ),
    )(x_p, params.w1, params.b1, params.w2, params.b2)

    # Strip batch / action padding (padded rows/cols are never consumed).
    return out[:B, :action_size]


def init_params(key, observation_size, fc1_unit=528, action_size=12 * 11):
    """PyTorch nn.Linear-style init: U[-1/sqrt(fan_in), +1/sqrt(fan_in)].
    Weights are stored (fan_in, fan_out) so the kernel computes x @ W."""
    k1, k2, k3, k4 = jax.random.split(key, 4)
    bound1 = 1.0 / jnp.sqrt(observation_size)
    bound2 = 1.0 / jnp.sqrt(fc1_unit)
    w1 = jax.random.uniform(k1, (observation_size, fc1_unit), jnp.float32,
                            -bound1, bound1)
    b1 = jax.random.uniform(k2, (1, fc1_unit), jnp.float32, -bound1, bound1)
    w2 = jax.random.uniform(k3, (fc1_unit, action_size), jnp.float32,
                            -bound2, bound2)
    b2 = jax.random.uniform(k4, (1, action_size), jnp.float32, -bound2, bound2)
    return w1, b1, w2, b2


def reference_forward(x, w1, b1, w2, b2):
    """Pure-JAX reference emulating the kernel numerics
    (bf16 matmul operands, f32 accumulation / bias / ReLU)."""
    bf = lambda a: a.astype(jnp.bfloat16).astype(jnp.float32)
    h = jnp.maximum(jnp.dot(bf(x), bf(w1)) + b1.reshape(1, -1), 0.0)
    y = jnp.maximum(jnp.dot(bf(h), bf(w2)) + b2.reshape(1, -1), 0.0)
    return y


if __name__ == "__main__":
    key = jax.random.PRNGKey(0)
    kx, kp = jax.random.split(key)

    batch = 2
    observation_size = 32        # small synthetic observation dim
    fc1_unit = 528               # module default
    action_size = 12 * 11        # = 132, hard-coded in the module

    x = jax.random.normal(kx, (batch, observation_size), jnp.float32)
    w1, b1, w2, b2 = init_params(kp, observation_size, fc1_unit, action_size)

    # Pad / cast weights ONCE; reuse across calls.
    params = prepare_params(w1, b1, w2, b2)

    fwd = jax.jit(qnetwork_forward, static_argnames=("action_size",))
    out = fwd(x, params, action_size=action_size)
    out = jax.block_until_ready(out)

    ref = reference_forward(x, w1, b1, w2, b2)
    assert out.shape == (batch, action_size)
    assert jnp.allclose(out, ref, atol=1e-2, rtol=1e-2), "mismatch vs. reference"

    print("KERNEL_OK")
</pallas_src>

<mosaic_0001>
module attributes {stable_mosaic.version = 11 : i64} {
  func.func @kernel(%arg0: i32, %arg1: memref<8x32xbf16, #tpu.memory_space<vmem>>, %arg2: memref<32x640xbf16, #tpu.memory_space<vmem>>, %arg3: memref<1x640xf32, #tpu.memory_space<vmem>>, %arg4: memref<640x256xbf16, #tpu.memory_space<vmem>>, %arg5: memref<1x256xf32, #tpu.memory_space<vmem>>, %arg6: memref<8x256xf32, #tpu.memory_space<vmem>>) attributes {dimension_semantics = [#tpu.dimension_semantics<parallel>], iteration_bounds = array<i64: 1>, scalar_prefetch = 0 : i64, scratch_operands = 0 : i64, tpu.core_type = #tpu.core_type<tc>, window_params = [{transform_indices = @transform_0, window_bounds = array<i64: 8, 32>}, {pipeline_mode = #tpu.pipeline_mode<synchronous>, transform_indices = @transform_1, window_bounds = array<i64: 32, 640>}, {pipeline_mode = #tpu.pipeline_mode<synchronous>, transform_indices = @transform_2, window_bounds = array<i64: 1, 640>}, {pipeline_mode = #tpu.pipeline_mode<synchronous>, transform_indices = @transform_3, window_bounds = array<i64: 640, 256>}, {pipeline_mode = #tpu.pipeline_mode<synchronous>, transform_indices = @transform_4, window_bounds = array<i64: 1, 256>}, {transform_indices = @transform_5, window_bounds = array<i64: 8, 256>}]} {
    %c0 = arith.constant 0 : index
    %c0_0 = arith.constant 0 : index
    %0 = vector.load %arg1[%c0, %c0_0] : memref<8x32xbf16, #tpu.memory_space<vmem>>, vector<8x32xbf16>
    %cst = arith.constant 0.000000e+00 : f32
    %1 = vector.broadcast %cst : f32 to vector<8x256xf32>
    %c0_1 = arith.constant 0 : index
    %c0_2 = arith.constant 0 : index
    %2 = vector.load %arg2[%c0_1, %c0_2] : memref<32x640xbf16, #tpu.memory_space<vmem>>, vector<32x128xbf16>
    %cst_3 = arith.constant dense<0.000000e+00> : vector<8x128xf32>
    %3 = tpu.matmul %0, %2, %cst_3 {dimension_numbers = #tpu.dot_dimension_numbers<[1], [0], [0], [1], [0, 0, 1, 1], [], []>} : vector<8x32xbf16>, vector<32x128xbf16>, vector<8x128xf32> -> vector<8x128xf32>
    %c0_4 = arith.constant 0 : index
    %c0_5 = arith.constant 0 : index
    %4 = vector.load %arg3[%c0_4, %c0_5] : memref<1x640xf32, #tpu.memory_space<vmem>>, vector<1x128xf32>
    %5 = vector.broadcast %4 : vector<1x128xf32> to vector<8x128xf32>
    %6 = arith.addf %3, %5 : vector<8x128xf32>
    %cst_6 = arith.constant 0.000000e+00 : f32
    %7 = vector.broadcast %cst_6 : f32 to vector<8x128xf32>
    %8 = arith.maximumf %6, %7 : vector<8x128xf32>
    %9 = arith.truncf %8 : vector<8x128xf32> to vector<8x128xbf16>
    %c0_7 = arith.constant 0 : index
    %c0_8 = arith.constant 0 : index
    %10 = vector.load %arg4[%c0_7, %c0_8] : memref<640x256xbf16, #tpu.memory_space<vmem>>, vector<128x256xbf16>
    %cst_9 = arith.constant dense<0.000000e+00> : vector<8x256xf32>
    %11 = tpu.matmul %9, %10, %cst_9 {dimension_numbers = #tpu.dot_dimension_numbers<[1], [0], [0], [1], [0, 0, 1, 1], [], []>} : vector<8x128xbf16>, vector<128x256xbf16>, vector<8x256xf32> -> vector<8x256xf32>
    %12 = arith.addf %1, %11 : vector<8x256xf32>
    %c0_10 = arith.constant 0 : index
    %c128 = arith.constant 128 : index
    %13 = vector.load %arg2[%c0_10, %c128] : memref<32x640xbf16, #tpu.memory_space<vmem>>, vector<32x128xbf16>
    %cst_11 = arith.constant dense<0.000000e+00> : vector<8x128xf32>
    %14 = tpu.matmul %0, %13, %cst_11 {dimension_numbers = #tpu.dot_dimension_numbers<[1], [0], [0], [1], [0, 0, 1, 1], [], []>} : vector<8x32xbf16>, vector<32x128xbf16>, vector<8x128xf32> -> vector<8x128xf32>
    %c0_12 = arith.constant 0 : index
    %c128_13 = arith.constant 128 : index
    %15 = vector.load %arg3[%c0_12, %c128_13] : memref<1x640xf32, #tpu.memory_space<vmem>>, vector<1x128xf32>
    %16 = vector.broadcast %15 : vector<1x128xf32> to vector<8x128xf32>
    %17 = arith.addf %14, %16 : vector<8x128xf32>
    %cst_14 = arith.constant 0.000000e+00 : f32
    %18 = vector.broadcast %cst_14 : f32 to vector<8x128xf32>
    %19 = arith.maximumf %17, %18 : vector<8x128xf32>
    %20 = arith.truncf %19 : vector<8x128xf32> to vector<8x128xbf16>
    %c128_15 = arith.constant 128 : index
    %c0_16 = arith.constant 0 : index
    %21 = vector.load %arg4[%c128_15, %c0_16] : memref<640x256xbf16, #tpu.memory_space<vmem>>, vector<128x256xbf16>
    %cst_17 = arith.constant dense<0.000000e+00> : vector<8x256xf32>
    %22 = tpu.matmul %20, %21, %cst_17 {dimension_numbers = #tpu.dot_dimension_numbers<[1], [0], [0], [1], [0, 0, 1, 1], [], []>} : vector<8x128xbf16>, vector<128x256xbf16>, vector<8x256xf32> -> vector<8x256xf32>
    %23 = arith.addf %12, %22 : vector<8x256xf32>
    %c0_18 = arith.constant 0 : index
    %c256 = arith.constant 256 : index
    %24 = vector.load %arg2[%c0_18, %c256] : memref<32x640xbf16, #tpu.memory_space<vmem>>, vector<32x128xbf16>
    %cst_19 = arith.constant dense<0.000000e+00> : vector<8x128xf32>
    %25 = tpu.matmul %0, %24, %cst_19 {dimension_numbers = #tpu.dot_dimension_numbers<[1], [0], [0], [1], [0, 0, 1, 1], [], []>} : vector<8x32xbf16>, vector<32x128xbf16>, vector<8x128xf32> -> vector<8x128xf32>
    %c0_20 = arith.constant 0 : index
    %c256_21 = arith.constant 256 : index
    %26 = vector.load %arg3[%c0_20, %c256_21] : memref<1x640xf32, #tpu.memory_space<vmem>>, vector<1x128xf32>
    %27 = vector.broadcast %26 : vector<1x128xf32> to vector<8x128xf32>
    %28 = arith.addf %25, %27 : vector<8x128xf32>
    %cst_22 = arith.constant 0.000000e+00 : f32
    %29 = vector.broadcast %cst_22 : f32 to vector<8x128xf32>
    %30 = arith.maximumf %28, %29 : vector<8x128xf32>
    %31 = arith.truncf %30 : vector<8x128xf32> to vector<8x128xbf16>
    %c256_23 = arith.constant 256 : index
    %c0_24 = arith.constant 0 : index
    %32 = vector.load %arg4[%c256_23, %c0_24] : memref<640x256xbf16, #tpu.memory_space<vmem>>, vector<128x256xbf16>
    %cst_25 = arith.constant dense<0.000000e+00> : vector<8x256xf32>
    %33 = tpu.matmul %31, %32, %cst_25 {dimension_numbers = #tpu.dot_dimension_numbers<[1], [0], [0], [1], [0, 0, 1, 1], [], []>} : vector<8x128xbf16>, vector<128x256xbf16>, vector<8x256xf32> -> vector<8x256xf32>
    %34 = arith.addf %23, %33 : vector<8x256xf32>
    %c0_26 = arith.constant 0 : index
    %c384 = arith.constant 384 : index
    %35 = vector.load %arg2[%c0_26, %c384] : memref<32x640xbf16, #tpu.memory_space<vmem>>, vector<32x128xbf16>
    %cst_27 = arith.constant dense<0.000000e+00> : vector<8x128xf32>
    %36 = tpu.matmul %0, %35, %cst_27 {dimension_numbers = #tpu.dot_dimension_numbers<[1], [0], [0], [1], [0, 0, 1, 1], [], []>} : vector<8x32xbf16>, vector<32x128xbf16>, vector<8x128xf32> -> vector<8x128xf32>
    %c0_28 = arith.constant 0 : index
    %c384_29 = arith.constant 384 : index
    %37 = vector.load %arg3[%c0_28, %c384_29] : memref<1x640xf32, #tpu.memory_space<vmem>>, vector<1x128xf32>
    %38 = vector.broadcast %37 : vector<1x128xf32> to vector<8x128xf32>
    %39 = arith.addf %36, %38 : vector<8x128xf32>
    %cst_30 = arith.constant 0.000000e+00 : f32
    %40 = vector.broadcast %cst_30 : f32 to vector<8x128xf32>
    %41 = arith.maximumf %39, %40 : vector<8x128xf32>
    %42 = arith.truncf %41 : vector<8x128xf32> to vector<8x128xbf16>
    %c384_31 = arith.constant 384 : index
    %c0_32 = arith.constant 0 : index
    %43 = vector.load %arg4[%c384_31, %c0_32] : memref<640x256xbf16, #tpu.memory_space<vmem>>, vector<128x256xbf16>
    %cst_33 = arith.constant dense<0.000000e+00> : vector<8x256xf32>
    %44 = tpu.matmul %42, %43, %cst_33 {dimension_numbers = #tpu.dot_dimension_numbers<[1], [0], [0], [1], [0, 0, 1, 1], [], []>} : vector<8x128xbf16>, vector<128x256xbf16>, vector<8x256xf32> -> vector<8x256xf32>
    %45 = arith.addf %34, %44 : vector<8x256xf32>
    %c0_34 = arith.constant 0 : index
    %c512 = arith.constant 512 : index
    %46 = vector.load %arg2[%c0_34, %c512] : memref<32x640xbf16, #tpu.memory_space<vmem>>, vector<32x128xbf16>
    %cst_35 = arith.constant dense<0.000000e+00> : vector<8x128xf32>
    %47 = tpu.matmul %0, %46, %cst_35 {dimension_numbers = #tpu.dot_dimension_numbers<[1], [0], [0], [1], [0, 0, 1, 1], [], []>} : vector<8x32xbf16>, vector<32x128xbf16>, vector<8x128xf32> -> vector<8x128xf32>
    %c0_36 = arith.constant 0 : index
    %c512_37 = arith.constant 512 : index
    %48 = vector.load %arg3[%c0_36, %c512_37] : memref<1x640xf32, #tpu.memory_space<vmem>>, vector<1x128xf32>
    %49 = vector.broadcast %48 : vector<1x128xf32> to vector<8x128xf32>
    %50 = arith.addf %47, %49 : vector<8x128xf32>
    %cst_38 = arith.constant 0.000000e+00 : f32
    %51 = vector.broadcast %cst_38 : f32 to vector<8x128xf32>
    %52 = arith.maximumf %50, %51 : vector<8x128xf32>
    %53 = arith.truncf %52 : vector<8x128xf32> to vector<8x128xbf16>
    %c512_39 = arith.constant 512 : index
    %c0_40 = arith.constant 0 : index
    %54 = vector.load %arg4[%c512_39, %c0_40] : memref<640x256xbf16, #tpu.memory_space<vmem>>, vector<128x256xbf16>
    %cst_41 = arith.constant dense<0.000000e+00> : vector<8x256xf32>
    %55 = tpu.matmul %53, %54, %cst_41 {dimension_numbers = #tpu.dot_dimension_numbers<[1], [0], [0], [1], [0, 0, 1, 1], [], []>} : vector<8x128xbf16>, vector<128x256xbf16>, vector<8x256xf32> -> vector<8x256xf32>
    %56 = arith.addf %45, %55 : vector<8x256xf32>
    %c0_42 = arith.constant 0 : index
    %c0_43 = arith.constant 0 : index
    %57 = vector.load %arg5[%c0_42, %c0_43] : memref<1x256xf32, #tpu.memory_space<vmem>>, vector<1x256xf32>
    %58 = vector.broadcast %57 : vector<1x256xf32> to vector<8x256xf32>
    %59 = arith.addf %56, %58 : vector<8x256xf32>
    %cst_44 = arith.constant 0.000000e+00 : f32
    %60 = vector.broadcast %cst_44 : f32 to vector<8x256xf32>
    %61 = arith.maximumf %59, %60 : vector<8x256xf32>
    %c0_45 = arith.constant 0 : index
    %c0_46 = arith.constant 0 : index
    %62 = vector.load %arg6[%c0_45, %c0_46] : memref<8x256xf32, #tpu.memory_space<vmem>>, vector<8x256xf32>
    tpu.vector_store %arg6[%c0_45, %c0_46], %61 {strides = array<i32>} : memref<8x256xf32, #tpu.memory_space<vmem>>, vector<8x256xf32>,
    return
  }
  func.func @transform_0(%arg0: i32) -> (i32, i32) {
    %c0_i32 = arith.constant 0 : i32
    %c0_i32_0 = arith.constant 0 : i32
    return %arg0, %c0_i32 : i32, i32
  }
  func.func @transform_1(%arg0: i32) -> (i32, i32) {
    %c0_i32 = arith.constant 0 : i32
    %c0_i32_0 = arith.constant 0 : i32
    %c0_i32_1 = arith.constant 0 : i32
    return %c0_i32, %c0_i32_0 : i32, i32
  }
  func.func @transform_2(%arg0: i32) -> (i32, i32) {
    %c0_i32 = arith.constant 0 : i32
    %c0_i32_0 = arith.constant 0 : i32
    %c0_i32_1 = arith.constant 0 : i32
    return %c0_i32, %c0_i32_0 : i32, i32
  }
  func.func @transform_3(%arg0: i32) -> (i32, i32) {
    %c0_i32 = arith.constant 0 : i32
    %c0_i32_0 = arith.constant 0 : i32
    %c0_i32_1 = arith.constant 0 : i32
    return %c0_i32, %c0_i32_0 : i32, i32
  }
  func.func @transform_4(%arg0: i32) -> (i32, i32) {
    %c0_i32 = arith.constant 0 : i32
    %c0_i32_0 = arith.constant 0 : i32
    %c0_i32_1 = arith.constant 0 : i32
    return %c0_i32, %c0_i32_0 : i32, i32
  }
  func.func @transform_5(%arg0: i32) -> (i32, i32) {
    %c0_i32 = arith.constant 0 : i32
    %c0_i32_0 = arith.constant 0 : i32
    return %arg0, %c0_i32 : i32, i32
  }
}

</mosaic_0001>

<llo_original>
// kernel: qnetwork_forward.1
$region0: #{qnetwork_forward.1}
  #allocation0 [shape = 'u32[]', space=smem, size = 0x4, offset = 0x4, fixed_abs, tag = 'smem constant byte address 0x4 - core index']
  #allocation1 [shape = 'u32[144,128]{1,0:T(1,128)}', space=vmem, size = 0x12000, scoped, tag = 'internal scratch']
  %s0 = inlined_call_operand.vmem [shape: bf16[8,32], index: 0, kind: input, shape index: {}]
  %s1 = inlined_call_operand.hbm [shape: bf16[32,640], index: 1, kind: input, shape index: {}]
  %s2 = inlined_call_operand.vmem [shape: f32[1,640], index: 2, kind: input, shape index: {}]
  %s3 = inlined_call_operand.hbm [shape: bf16[640,256], index: 3, kind: input, shape index: {}]
  %s4 = inlined_call_operand.vmem [shape: f32[1,256], index: 4, kind: input, shape index: {}]
  %s5 = inlined_call_operand.vmem [shape: f32[8,256], index: 5, kind: output, shape index: {}]
  %s6 = sld [smem:[#allocation0]]
  $region38: #{qnetwork_forward.1} parent=0
    _
  %s8 = ssub.s32 1, %s6
  %s9 = scalar_select 0, %s8, %s6
  $region1: #{qnetwork_forward.1} parent=0
    #allocation2 [shape = 'u8[40960]{0}', space=vmem, size = 0xa000, scoped, tag = 'input window, operand 1, single buffered']
    #allocation3 [shape = 's32[1]{0}', space=sflag, size = 0x4, scoped, tag = 'scoped memory for qnetwork_forward.1']
    #allocation4 [shape = 'u8[327680]{0}', space=vmem, size = 0x50000, scoped, tag = 'input window, operand 3, single buffered']
    #allocation5 [shape = 's32[1]{0}', space=sflag, size = 0x4, scoped, tag = 'scoped memory for qnetwork_forward.1']
    %10 = vsyncpa [#allocation3], 0
    %11 = vsyncpa [#allocation5], 0
    // Predicated region
    $region2: #{qnetwork_forward.1} parent=1 // pred_check
      _
    $region3: #{qnetwork_forward.1} parent=1 // pred_check_branch
      %13 = sbr.rel (0) target = $region5
    $region4: #{qnetwork_forward.1} parent=1 // pred_region
      _
    $region5: #{qnetwork_forward.1} parent=1 // pred_fallthru
      _
    // Predicated region
    $region6: #{qnetwork_forward.1} parent=1 // pred_check
      _
    $region7: #{qnetwork_forward.1} parent=1 // pred_check_branch
      %15 = sbr.rel (0) target = $region9
    $region8: #{qnetwork_forward.1} parent=1 // pred_region
      %s17 = ssub.s32 1280, 1280
      %18 = vsyncadd [#allocation3], %s17
      %s19 = sshll.u32 [#allocation2], 4
      %s20 = int_to_ptr.vmem [resolvable:$true] %s19
      %25 = dma.hbm_to_vmem [thread:$0]  %s1, 1280, %s20, [#allocation3], 320, 320, 20
    $region9: #{qnetwork_forward.1} parent=1 // pred_fallthru
      _
    // Predicated region
    $region10: #{qnetwork_forward.1} parent=1 // pred_check
      _
    $region11: #{qnetwork_forward.1} parent=1 // pred_check_branch
      %27 = sbr.rel (0) target = $region13
    $region12: #{qnetwork_forward.1} parent=1 // pred_region
      _
    $region13: #{qnetwork_forward.1} parent=1 // pred_fallthru
      _
    // Predicated region
    $region14: #{qnetwork_forward.1} parent=1 // pred_check
      _
    $region15: #{qnetwork_forward.1} parent=1 // pred_check_branch
      %29 = sbr.rel (0) target = $region17
    $region16: #{qnetwork_forward.1} parent=1 // pred_region
      %s31 = ssub.s32 10240, 10240
      %32 = vsyncadd [#allocation5], %s31
      %s33 = sshll.u32 [#allocation4], 4
      %s34 = int_to_ptr.vmem [resolvable:$true] %s33
      %39 = dma.hbm_to_vmem [thread:$0]  %s3, 10240, %s34, [#allocation5], 128, 128, 8
    $region17: #{qnetwork_forward.1} parent=1 // pred_fallthru
      _
    // Predicated region
    $region18: #{qnetwork_forward.1} parent=1 // pred_check
      _
    $region19: #{qnetwork_forward.1} parent=1 // pred_check_branch
      %41 = sbr.rel (0) target = $region21
    $region20: #{qnetwork_forward.1} parent=1 // pred_region
      _
    $region21: #{qnetwork_forward.1} parent=1 // pred_fallthru
      _
    // Predicated region
    $region22: #{qnetwork_forward.1} parent=1 // pred_check
      _
    $region23: #{qnetwork_forward.1} parent=1 // pred_check_branch
      %43 = sbr.rel (0) target = $region25
    $region24: #{qnetwork_forward.1} parent=1 // pred_region
      %44 = dma.done [#allocation3], 1280
    $region25: #{qnetwork_forward.1} parent=1 // pred_fallthru
      _
    // Predicated region
    $region26: #{qnetwork_forward.1} parent=1 // pred_check
      _
    $region27: #{qnetwork_forward.1} parent=1 // pred_check_branch
      %46 = sbr.rel (0) target = $region29
    $region28: #{qnetwork_forward.1} parent=1 // pred_region
      %47 = dma.done [#allocation5], 10240
    $region29: #{qnetwork_forward.1} parent=1 // pred_fallthru
      _
    %v49 = vld [vmem:[%s0] sm:$0xf]
    %v50 = vld [vmem:[#allocation2] sm:$0xf]
    %v51 = vld [vmem:[#allocation2 + $0x14] sm:$0xf]
    %v52 = vld [vmem:[#allocation2 + $0x28] sm:$0xf]
    %v53 = vld [vmem:[#allocation2 + $0x3c] sm:$0xf]
    %v54 = vld [vmem:[%s2] sm:$0x1]
    %v56 = vlaneseq
    %v57 = vshrl.u32 %v56, 7
    %v58 = vsub.s32 0, %v57
    %v59 = vrot.slane %v54, %v58
    %v65 = vunpack.c.l.b16 %v50
    %v66 = vunpack.c.l.b16 %v51
    %v67 = vunpack.c.l.b16 %v52
    %v68 = vunpack.c.l.b16 %v53
    %v69 = vpack.c.b16 %v66, %v65
    %v70 = vpack.c.b16 %v68, %v67
    %vm73 = vcmask 261120
    %v75 = vsel %vm73, %v49, 0
    %77 = vmatprep.subr.bf16.mxu0 0
    %78 = vmatpush1.bf16.msra.mxu0 %v69
    %79 = vmatprep.subr.bf16.mxu0 0
    %80 = vmatpush1.bf16.msra.mxu0 %v70
    %81 = vmatprep.subr.bf16.mxu0 0
    %82 = vmatpush1.bf16.msra.mxu0 0
    %83 = vmatprep.subr.bf16.mxu0 0
    %84 = vmatpush1.bf16.msra.mxu0 0
    %85 = vmatprep.subr.bf16.mxu0 0
    %86 = vmatpush1.bf16.msra.mxu0 0
    %87 = vmatprep.subr.bf16.mxu0 0
    %88 = vmatpush1.bf16.msra.mxu0 0
    %89 = vmatprep.subr.bf16.mxu0 0
    %90 = vmatpush1.bf16.msra.mxu0 0
    %91 = vmatprep.subr.bf16.mxu0 0
    %92 = vmatpush1.bf16.msra.mxu0 0
    %93 = vmatprep.subr.bf16.mxu0 0
    %94 = vmatpush1.bf16.msra.mxu0 0
    %95 = vmatprep.subr.bf16.mxu0 0
    %96 = vmatpush1.bf16.msra.mxu0 0
    %97 = vmatprep.subr.bf16.mxu0 0
    %98 = vmatpush1.bf16.msra.mxu0 0
    %99 = vmatprep.subr.bf16.mxu0 0
    %100 = vmatpush1.bf16.msra.mxu0 0
    %101 = vmatprep.subr.bf16.mxu0 0
    %102 = vmatpush1.bf16.msra.mxu0 0
    %103 = vmatprep.subr.bf16.mxu0 0
    %104 = vmatpush1.bf16.msra.mxu0 0
    %105 = vmatprep.subr.bf16.mxu0 0
    %106 = vmatpush1.bf16.msra.mxu0 0
    %107 = vmatprep.subr.bf16.mxu0 0
    %108 = vmatpush1.bf16.msra.mxu0 0
    %109 = vmatprep.mubr.bf16.mxu0 0
    %110 = vmatmul.mubr.bf16.gmra.mrb[0].mxu0 %v75
    %v111 = vpop.f32.mrb[0].mxu0
    %v112 = vadd.f32 %v59, %v111
    %v113 = vpop.f32.mrb[0].mxu0
    %v114 = vpop.f32.mrb[0].mxu0
    %v115 = vpop.f32.mrb[0].mxu0
    %116 = vdwg.mxu0
    %v117 = vmax.f32 %v112, 0.0
    %v118 = vpack.c.bf16 %v117, %v117
    %v119 = vld [vmem:[#allocation4] sm:$0xff]
    %v120 = vld [vmem:[#allocation4 + $0x8] sm:$0xff]
    %v121 = vld [vmem:[#allocation4 + $0x10] sm:$0xff]
    %v122 = vld [vmem:[#allocation4 + $0x18] sm:$0xff]
    %v123 = vld [vmem:[#allocation4 + $0x20] sm:$0xff]
    %v124 = vld [vmem:[#allocation4 + $0x28] sm:$0xff]
    %v125 = vld [vmem:[#allocation4 + $0x30] sm:$0xff]
    %v126 = vld [vmem:[#allocation4 + $0x38] sm:$0xff]
    %v127 = vld [vmem:[#allocation4 + $0x40] sm:$0xff]
    %v128 = vld [vmem:[#allocation4 + $0x48] sm:$0xff]
    %v129 = vld [vmem:[#allocation4 + $0x50] sm:$0xff]
    %v130 = vld [vmem:[#allocation4 + $0x58] sm:$0xff]
    %v131 = vld [vmem:[#allocation4 + $0x60] sm:$0xff]
    %v132 = vld [vmem:[#allocation4 + $0x68] sm:$0xff]
    %v133 = vld [vmem:[#allocation4 + $0x70] sm:$0xff]
    %v134 = vld [vmem:[#allocation4 + $0x78] sm:$0xff]
    %v135 = vld [vmem:[#allocation2 + $0x4] sm:$0xf]
    %v136 = vld [vmem:[#allocation2 + $0x18] sm:$0xf]
    %v137 = vld [vmem:[#allocation2 + $0x2c] sm:$0xf]
    %v138 = vld [vmem:[#allocation2 + $0x40] sm:$0xf]
    %v139 = vld [vmem:[%s2 + $0x1] sm:$0x1]
    %v141 = vlaneseq
    %v142 = vshrl.u32 %v141, 7
    %v143 = vsub.s32 0, %v142
    %v144 = vrot.slane %v139, %v143
    %v150 = vunpack.c.l.b16 %v135
    %v151 = vunpack.c.l.b16 %v136
    %v152 = vunpack.c.l.b16 %v137
    %v153 = vunpack.c.l.b16 %v138
    %v154 = vpack.c.b16 %v151, %v150
    %v155 = vpack.c.b16 %v153, %v152
    %158 = vmatprep.subr.bf16.mxu0 0
    %159 = vmatpush1.bf16.msra.mxu0 %v154
    %160 = vmatprep.subr.bf16.mxu0 0
    %161 = vmatpush1.bf16.msra.mxu0 %v155
    %162 = vmatprep.subr.bf16.mxu0 0
    %163 = vmatpush1.bf16.msra.mxu0 0
    %164 = vmatprep.subr.bf16.mxu0 0
    %165 = vmatpush1.bf16.msra.mxu0 0
    %166 = vmatprep.subr.bf16.mxu0 0
    %167 = vmatpush1.bf16.msra.mxu0 0
    %168 = vmatprep.subr.bf16.mxu0 0
    %169 = vmatpush1.bf16.msra.mxu0 0
    %170 = vmatprep.subr.bf16.mxu0 0
    %171 = vmatpush1.bf16.msra.mxu0 0
    %172 = vmatprep.subr.bf16.mxu0 0
    %173 = vmatpush1.bf16.msra.mxu0 0
    %174 = vmatprep.subr.bf16.mxu0 0
    %175 = vmatpush1.bf16.msra.mxu0 0
    %176 = vmatprep.subr.bf16.mxu0 0
    %177 = vmatpush1.bf16.msra.mxu0 0
    %178 = vmatprep.subr.bf16.mxu0 0
    %179 = vmatpush1.bf16.msra.mxu0 0
    %180 = vmatprep.subr.bf16.mxu0 0
    %181 = vmatpush1.bf16.msra.mxu0 0
    %182 = vmatprep.subr.bf16.mxu0 0
    %183 = vmatpush1.bf16.msra.mxu0 0
    %184 = vmatprep.subr.bf16.mxu0 0
    %185 = vmatpush1.bf16.msra.mxu0 0
    %186 = vmatprep.subr.bf16.mxu0 0
    %187 = vmatpush1.bf16.msra.mxu0 0
    %188 = vmatprep.subr.bf16.mxu0 0
    %189 = vmatpush1.bf16.msra.mxu0 0
    %190 = vmatprep.mubr.bf16.mxu0 0
    %191 = vmatmul.mubr.bf16.gmra.mrb[0].mxu0 %v75
    %v192 = vpop.f32.mrb[0].mxu0
    %v193 = vadd.f32 %v144, %v192
    %v194 = vpop.f32.mrb[0].mxu0
    %v195 = vpop.f32.mrb[0].mxu0
    %v196 = vpop.f32.mrb[0].mxu0
    %197 = vdwg.mxu0
    %v198 = vmax.f32 %v193, 0.0
    %v199 = vpack.c.bf16 %v198, %v198
    %v200 = vld [vmem:[#allocation4 + $0x80] sm:$0xff]
    %v201 = vld [vmem:[#allocation4 + $0x88] sm:$0xff]
    %v202 = vld [vmem:[#allocation4 + $0x90] sm:$0xff]
    %v203 = vld [vmem:[#allocation4 + $0x98] sm:$0xff]
    %v204 = vld [vmem:[#allocation4 + $0xa0] sm:$0xff]
    %v205 = vld [vmem:[#allocation4 + $0xa8] sm:$0xff]
    %v206 = vld [vmem:[#allocation4 + $0xb0] sm:$0xff]
    %v207 = vld [vmem:[#allocation4 + $0xb8] sm:$0xff]
    %v208 = vld [vmem:[#allocation4 + $0xc0] sm:$0xff]
    %v209 = vld [vmem:[#allocation4 + $0xc8] sm:$0xff]
    %v210 = vld [vmem:[#allocation4 + $0xd0] sm:$0xff]
    %v211 = vld [vmem:[#allocation4 + $0xd8] sm:$0xff]
    %v212 = vld [vmem:[#allocation4 + $0xe0] sm:$0xff]
    %v213 = vld [vmem:[#allocation4 + $0xe8] sm:$0xff]
    %v214 = vld [vmem:[#allocation4 + $0xf0] sm:$0xff]
    %v215 = vld [vmem:[#allocation4 + $0xf8] sm:$0xff]
    %v232 = vunpack.c.l.b16 %v200
    %v233 = vunpack.c.h.b16 %v200
    %v234 = vunpack.c.l.b16 %v201
    %v235 = vunpack.c.h.b16 %v201
    %v236 = vunpack.c.l.b16 %v202
    %v237 = vunpack.c.h.b16 %v202
    %v238 = vunpack.c.l.b16 %v203
    %v239 = vunpack.c.h.b16 %v203
    %v240 = vunpack.c.l.b16 %v204
    %v241 = vunpack.c.h.b16 %v204
    %v242 = vunpack.c.l.b16 %v205
    %v243 = vunpack.c.h.b16 %v205
    %v244 = vunpack.c.l.b16 %v206
    %v245 = vunpack.c.h.b16 %v206
    %v246 = vunpack.c.l.b16 %v207
    %v247 = vunpack.c.h.b16 %v207
    %v248 = vunpack.c.l.b16 %v208
    %v249 = vunpack.c.h.b16 %v208
    %v250 = vunpack.c.l.b16 %v209
    %v251 = vunpack.c.h.b16 %v209
    %v252 = vunpack.c.l.b16 %v210
    %v253 = vunpack.c.h.b16 %v210
    %v254 = vunpack.c.l.b16 %v211
    %v255 = vunpack.c.h.b16 %v211
    %v256 = vunpack.c.l.b16 %v212
    %v257 = vunpack.c.h.b16 %v212
    %v258 = vunpack.c.l.b16 %v213
    %v259 = vunpack.c.h.b16 %v213
    %v260 = vunpack.c.l.b16 %v214
    %v261 = vunpack.c.h.b16 %v214
    %v262 = vunpack.c.l.b16 %v215
    %v263 = vunpack.c.h.b16 %v215
    %v264 = vpack.c.b16 %v234, %v232
    %v265 = vpack.c.b16 %v235, %v233
    %v266 = vpack.c.b16 %v238, %v236
    %v267 = vpack.c.b16 %v239, %v237
    %v268 = vpack.c.b16 %v242, %v240
    %v269 = vpack.c.b16 %v243, %v241
    %v270 = vpack.c.b16 %v246, %v244
    %v271 = vpack.c.b16 %v247, %v245
    %v272 = vpack.c.b16 %v250, %v248
    %v273 = vpack.c.b16 %v251, %v249
    %v274 = vpack.c.b16 %v254, %v252
    %v275 = vpack.c.b16 %v255, %v253
    %v276 = vpack.c.b16 %v258, %v256
    %v277 = vpack.c.b16 %v259, %v257
    %v278 = vpack.c.b16 %v262, %v260
    %v279 = vpack.c.b16 %v263, %v261
    %296 = vmatprep.subr.bf16.mxu0 %v265
    %297 = vmatpush1.bf16.msra.mxu0 %v264
    %298 = vmatprep.subr.bf16.mxu0 %v267
    %299 = vmatpush1.bf16.msra.mxu0 %v266
    %300 = vmatprep.subr.bf16.mxu0 %v269
    %301 = vmatpush1.bf16.msra.mxu0 %v268
    %302 = vmatprep.subr.bf16.mxu0 %v271
    %303 = vmatpush1.bf16.msra.mxu0 %v270
    %304 = vmatprep.subr.bf16.mxu0 %v273
    %305 = vmatpush1.bf16.msra.mxu0 %v272
    %306 = vmatprep.subr.bf16.mxu0 %v275
    %307 = vmatpush1.bf16.msra.mxu0 %v274
    %308 = vmatprep.subr.bf16.mxu0 %v277
    %309 = vmatpush1.bf16.msra.mxu0 %v276
    %310 = vmatprep.subr.bf16.mxu0 %v279
    %311 = vmatpush1.bf16.msra.mxu0 %v278
    %312 = vmatprep.subr.bf16.mxu0 0
    %313 = vmatpush1.bf16.msra.mxu0 0
    %314 = vmatprep.subr.bf16.mxu0 0
    %315 = vmatpush1.bf16.msra.mxu0 0
    %316 = vmatprep.subr.bf16.mxu0 0
    %317 = vmatpush1.bf16.msra.mxu0 0
    %318 = vmatprep.subr.bf16.mxu0 0
    %319 = vmatpush1.bf16.msra.mxu0 0
    %320 = vmatprep.subr.bf16.mxu0 0
    %321 = vmatpush1.bf16.msra.mxu0 0
    %322 = vmatprep.subr.bf16.mxu0 0
    %323 = vmatpush1.bf16.msra.mxu0 0
    %324 = vmatprep.subr.bf16.mxu0 0
    %325 = vmatpush1.bf16.msra.mxu0 0
    %326 = vmatprep.subr.bf16.mxu0 0
    %327 = vmatpush1.bf16.msra.mxu0 0
    %328 = vmatprep.mubr.bf16.mxu0 0
    %329 = vmatmul.mubr.bf16.gmra.mrb[0].mxu0 %v199
    %v330 = vpop.f32.mrb[0].mxu0
    %v331 = vadd.f32 0.0, %v330
    %v332 = vpop.f32.mrb[0].mxu0
    %v333 = vadd.f32 0.0, %v332
    %v334 = vpop.f32.mrb[0].mxu0
    %v335 = vpop.f32.mrb[0].mxu0
    %336 = vdwg.mxu0
    %v353 = vunpack.c.l.b16 %v119
    %v354 = vunpack.c.h.b16 %v119
    %v355 = vunpack.c.l.b16 %v120
    %v356 = vunpack.c.h.b16 %v120
    %v357 = vunpack.c.l.b16 %v121
    %v358 = vunpack.c.h.b16 %v121
    %v359 = vunpack.c.l.b16 %v122
    %v360 = vunpack.c.h.b16 %v122
    %v361 = vunpack.c.l.b16 %v123
    %v362 = vunpack.c.h.b16 %v123
    %v363 = vunpack.c.l.b16 %v124
    %v364 = vunpack.c.h.b16 %v124
    %v365 = vunpack.c.l.b16 %v125
    %v366 = vunpack.c.h.b16 %v125
    %v367 = vunpack.c.l.b16 %v126
    %v368 = vunpack.c.h.b16 %v126
    %v369 = vunpack.c.l.b16 %v127
    %v370 = vunpack.c.h.b16 %v127
    %v371 = vunpack.c.l.b16 %v128
    %v372 = vunpack.c.h.b16 %v128
    %v373 = vunpack.c.l.b16 %v129
    %v374 = vunpack.c.h.b16 %v129
    %v375 = vunpack.c.l.b16 %v130
    %v376 = vunpack.c.h.b16 %v130
    %v377 = vunpack.c.l.b16 %v131
    %v378 = vunpack.c.h.b16 %v131
    %v379 = vunpack.c.l.b16 %v132
    %v380 = vunpack.c.h.b16 %v132
    %v381 = vunpack.c.l.b16 %v133
    %v382 = vunpack.c.h.b16 %v133
    %v383 = vunpack.c.l.b16 %v134
    %v384 = vunpack.c.h.b16 %v134
    %v385 = vpack.c.b16 %v355, %v353
    %v386 = vpack.c.b16 %v356, %v354
    %v387 = vpack.c.b16 %v359, %v357
    %v388 = vpack.c.b16 %v360, %v358
    %v389 = vpack.c.b16 %v363, %v361
    %v390 = vpack.c.b16 %v364, %v362
    %v391 = vpack.c.b16 %v367, %v365
    %v392 = vpack.c.b16 %v368, %v366
    %v393 = vpack.c.b16 %v371, %v369
    %v394 = vpack.c.b16 %v372, %v370
    %v395 = vpack.c.b16 %v375, %v373
    %v396 = vpack.c.b16 %v376, %v374
    %v397 = vpack.c.b16 %v379, %v377
    %v398 = vpack.c.b16 %v380, %v378
    %v399 = vpack.c.b16 %v383, %v381
    %v400 = vpack.c.b16 %v384, %v382
    %417 = vmatprep.subr.bf16.mxu0 %v386
    %418 = vmatpush1.bf16.msra.mxu0 %v385
    %419 = vmatprep.subr.bf16.mxu0 %v388
    %420 = vmatpush1.bf16.msra.mxu0 %v387
    %421 = vmatprep.subr.bf16.mxu0 %v390
    %422 = vmatpush1.bf16.msra.mxu0 %v389
    %423 = vmatprep.subr.bf16.mxu0 %v392
    %424 = vmatpush1.bf16.msra.mxu0 %v391
    %425 = vmatprep.subr.bf16.mxu0 %v394
    %426 = vmatpush1.bf16.msra.mxu0 %v393
    %427 = vmatprep.subr.bf16.mxu0 %v396
    %428 = vmatpush1.bf16.msra.mxu0 %v395
    %429 = vmatprep.subr.bf16.mxu0 %v398
    %430 = vmatpush1.bf16.msra.mxu0 %v397
    %431 = vmatprep.subr.bf16.mxu0 %v400
    %432 = vmatpush1.bf16.msra.mxu0 %v399
    %433 = vmatprep.subr.bf16.mxu0 0
    %434 = vmatpush1.bf16.msra.mxu0 0
    %435 = vmatprep.subr.bf16.mxu0 0
    %436 = vmatpush1.bf16.msra.mxu0 0
    %437 = vmatprep.subr.bf16.mxu0 0
    %438 = vmatpush1.bf16.msra.mxu0 0
    %439 = vmatprep.subr.bf16.mxu0 0
    %440 = vmatpush1.bf16.msra.mxu0 0
    %441 = vmatprep.subr.bf16.mxu0 0
    %442 = vmatpush1.bf16.msra.mxu0 0
    %443 = vmatprep.subr.bf16.mxu0 0
    %444 = vmatpush1.bf16.msra.mxu0 0
    %445 = vmatprep.subr.bf16.mxu0 0
    %446 = vmatpush1.bf16.msra.mxu0 0
    %447 = vmatprep.subr.bf16.mxu0 0
    %448 = vmatpush1.bf16.msra.mxu0 0
    %449 = vmatprep.mubr.bf16.mxu0 0
    %450 = vmatmul.mubr.bf16.gmra.mrb[0].mxu0 %v118
    %v451 = vpop.f32.mrb[0].mxu0
    %v452 = vadd.f32 %v331, %v451
    %v453 = vpop.f32.mrb[0].mxu0
    %v454 = vadd.f32 %v333, %v453
    %v455 = vpop.f32.mrb[0].mxu0
    %v456 = vpop.f32.mrb[0].mxu0
    %457 = vdwg.mxu0
    %v458 = vld [vmem:[#allocation2 + $0x8] sm:$0xf]
    %v459 = vld [vmem:[#allocation2 + $0x1c] sm:$0xf]
    %v460 = vld [vmem:[#allocation2 + $0x30] sm:$0xf]
    %v461 = vld [vmem:[#allocation2 + $0x44] sm:$0xf]
    %v462 = vld [vmem:[%s2 + $0x2] sm:$0x1]
    %v464 = vlaneseq
    %v465 = vshrl.u32 %v464, 7
    %v466 = vsub.s32 0, %v465
    %v467 = vrot.slane %v462, %v466
    %v473 = vunpack.c.l.b16 %v458
    %v474 = vunpack.c.l.b16 %v459
    %v475 = vunpack.c.l.b16 %v460
    %v476 = vunpack.c.l.b16 %v461
    %v477 = vpack.c.b16 %v474, %v473
    %v478 = vpack.c.b16 %v476, %v475
    %481 = vmatprep.subr.bf16.mxu0 0
    %482 = vmatpush1.bf16.msra.mxu0 %v477
    %483 = vmatprep.subr.bf16.mxu0 0
    %484 = vmatpush1.bf16.msra.mxu0 %v478
    %485 = vmatprep.subr.bf16.mxu0 0
    %486 = vmatpush1.bf16.msra.mxu0 0
    %487 = vmatprep.subr.bf16.mxu0 0
    %488 = vmatpush1.bf16.msra.mxu0 0
    %489 = vmatprep.subr.bf16.mxu0 0
    %490 = vmatpush1.bf16.msra.mxu0 0
    %491 = vmatprep.subr.bf16.mxu0 0
    %492 = vmatpush1.bf16.msra.mxu0 0
    %493 = vmatprep.subr.bf16.mxu0 0
    %494 = vmatpush1.bf16.msra.mxu0 0
    %495 = vmatprep.subr.bf16.mxu0 0
    %496 = vmatpush1.bf16.msra.mxu0 0
    %497 = vmatprep.subr.bf16.mxu0 0
    %498 = vmatpush1.bf16.msra.mxu0 0
    %499 = vmatprep.subr.bf16.mxu0 0
    %500 = vmatpush1.bf16.msra.mxu0 0
    %501 = vmatprep.subr.bf16.mxu0 0
    %502 = vmatpush1.bf16.msra.mxu0 0
    %503 = vmatprep.subr.bf16.mxu0 0
    %504 = vmatpush1.bf16.msra.mxu0 0
    %505 = vmatprep.subr.bf16.mxu0 0
    %506 = vmatpush1.bf16.msra.mxu0 0
    %507 = vmatprep.subr.bf16.mxu0 0
    %508 = vmatpush1.bf16.msra.mxu0 0
    %509 = vmatprep.subr.bf16.mxu0 0
    %510 = vmatpush1.bf16.msra.mxu0 0
    %511 = vmatprep.subr.bf16.mxu0 0
    %512 = vmatpush1.bf16.msra.mxu0 0
    %513 = vmatprep.mubr.bf16.mxu0 0
    %514 = vmatmul.mubr.bf16.gmra.mrb[0].mxu0 %v75
    %v515 = vpop.f32.mrb[0].mxu0
    %v516 = vadd.f32 %v467, %v515
    %v517 = vpop.f32.mrb[0].mxu0
    %v518 = vpop.f32.mrb[0].mxu0
    %v519 = vpop.f32.mrb[0].mxu0
    %520 = vdwg.mxu0
    %v521 = vmax.f32 %v516, 0.0
    %v522 = vpack.c.bf16 %v521, %v521
    %v523 = vld [vmem:[#allocation4 + $0x100] sm:$0xff]
    %v524 = vld [vmem:[#allocation4 + $0x108] sm:$0xff]
    %v525 = vld [vmem:[#allocation4 + $0x110] sm:$0xff]
    %v526 = vld [vmem:[#allocation4 + $0x118] sm:$0xff]
    %v527 = vld [vmem:[#allocation4 + $0x120] sm:$0xff]
    %v528 = vld [vmem:[#allocation4 + $0x128] sm:$0xff]
    %v529 = vld [vmem:[#allocation4 + $0x130] sm:$0xff]
    %v530 = vld [vmem:[#allocation4 + $0x138] sm:$0xff]
    %v531 = vld [vmem:[#allocation4 + $0x140] sm:$0xff]
    %v532 = vld [vmem:[#allocation4 + $0x148] sm:$0xff]
    %v533 = vld [vmem:[#allocation4 + $0x150] sm:$0xff]
    %v534 = vld [vmem:[#allocation4 + $0x158] sm:$0xff]
    %v535 = vld [vmem:[#allocation4 + $0x160] sm:$0xff]
    %v536 = vld [vmem:[#allocation4 + $0x168] sm:$0xff]
    %v537 = vld [vmem:[#allocation4 + $0x170] sm:$0xff]
    %v538 = vld [vmem:[#allocation4 + $0x178] sm:$0xff]
    %v555 = vunpack.c.l.b16 %v523
    %v556 = vunpack.c.h.b16 %v523
    %v557 = vunpack.c.l.b16 %v524
    %v558 = vunpack.c.h.b16 %v524
    %v559 = vunpack.c.l.b16 %v525
    %v560 = vunpack.c.h.b16 %v525
    %v561 = vunpack.c.l.b16 %v526
    %v562 = vunpack.c.h.b16 %v526
    %v563 = vunpack.c.l.b16 %v527
    %v564 = vunpack.c.h.b16 %v527
    %v565 = vunpack.c.l.b16 %v528
    %v566 = vunpack.c.h.b16 %v528
    %v567 = vunpack.c.l.b16 %v529
    %v568 = vunpack.c.h.b16 %v529
    %v569 = vunpack.c.l.b16 %v530
    %v570 = vunpack.c.h.b16 %v530
    %v571 = vunpack.c.l.b16 %v531
    %v572 = vunpack.c.h.b16 %v531
    %v573 = vunpack.c.l.b16 %v532
    %v574 = vunpack.c.h.b16 %v532
    %v575 = vunpack.c.l.b16 %v533
    %v576 = vunpack.c.h.b16 %v533
    %v577 = vunpack.c.l.b16 %v534
    %v578 = vunpack.c.h.b16 %v534
    %v579 = vunpack.c.l.b16 %v535
    %v580 = vunpack.c.h.b16 %v535
    %v581 = vunpack.c.l.b16 %v536
    %v582 = vunpack.c.h.b16 %v536
    %v583 = vunpack.c.l.b16 %v537
    %v584 = vunpack.c.h.b16 %v537
    %v585 = vunpack.c.l.b16 %v538
    %v586 = vunpack.c.h.b16 %v538
    %v587 = vpack.c.b16 %v557, %v555
    %v588 = vpack.c.b16 %v558, %v556
    %v589 = vpack.c.b16 %v561, %v559
    %v590 = vpack.c.b16 %v562, %v560
    %v591 = vpack.c.b16 %v565, %v563
    %v592 = vpack.c.b16 %v566, %v564
    %v593 = vpack.c.b16 %v569, %v567
    %v594 = vpack.c.b16 %v570, %v568
    %v595 = vpack.c.b16 %v573, %v571
    %v596 = vpack.c.b16 %v574, %v572
    %v597 = vpack.c.b16 %v577, %v575
    %v598 = vpack.c.b16 %v578, %v576
    %v599 = vpack.c.b16 %v581, %v579
    %v600 = vpack.c.b16 %v582, %v580
    %v601 = vpack.c.b16 %v585, %v583
    %v602 = vpack.c.b16 %v586, %v584
    %619 = vmatprep.subr.bf16.mxu0 %v588
    %620 = vmatpush1.bf16.msra.mxu0 %v587
    %621 = vmatprep.subr.bf16.mxu0 %v590
    %622 = vmatpush1.bf16.msra.mxu0 %v589
    %623 = vmatprep.subr.bf16.mxu0 %v592
    %624 = vmatpush1.bf16.msra.mxu0 %v591
    %625 = vmatprep.subr.bf16.mxu0 %v594
    %626 = vmatpush1.bf16.msra.mxu0 %v593
    %627 = vmatprep.subr.bf16.mxu0 %v596
    %628 = vmatpush1.bf16.msra.mxu0 %v595
    %629 = vmatprep.subr.bf16.mxu0 %v598
    %630 = vmatpush1.bf16.msra.mxu0 %v597
    %631 = vmatprep.subr.bf16.mxu0 %v600
    %632 = vmatpush1.bf16.msra.mxu0 %v599
    %633 = vmatprep.subr.bf16.mxu0 %v602
    %634 = vmatpush1.bf16.msra.mxu0 %v601
    %635 = vmatprep.subr.bf16.mxu0 0
    %636 = vmatpush1.bf16.msra.mxu0 0
    %637 = vmatprep.subr.bf16.mxu0 0
    %638 = vmatpush1.bf16.msra.mxu0 0
    %639 = vmatprep.subr.bf16.mxu0 0
    %640 = vmatpush1.bf16.msra.mxu0 0
    %641 = vmatprep.subr.bf16.mxu0 0
    %642 = vmatpush1.bf16.msra.mxu0 0
    %643 = vmatprep.subr.bf16.mxu0 0
    %644 = vmatpush1.bf16.msra.mxu0 0
    %645 = vmatprep.subr.bf16.mxu0 0
    %646 = vmatpush1.bf16.msra.mxu0 0
    %647 = vmatprep.subr.bf16.mxu0 0
    %648 = vmatpush1.bf16.msra.mxu0 0
    %649 = vmatprep.subr.bf16.mxu0 0
    %650 = vmatpush1.bf16.msra.mxu0 0
    %651 = vmatprep.mubr.bf16.mxu0 0
    %652 = vmatmul.mubr.bf16.gmra.mrb[0].mxu0 %v522
    %v653 = vpop.f32.mrb[0].mxu0
    %v654 = vadd.f32 0.0, %v653
    %v655 = vpop.f32.mrb[0].mxu0
    %v656 = vadd.f32 0.0, %v655
    %v657 = vpop.f32.mrb[0].mxu0
    %v658 = vpop.f32.mrb[0].mxu0
    %659 = vdwg.mxu0
    %v660 = vadd.f32 %v452, %v654
    %v661 = vadd.f32 %v454, %v656
    %v662 = vld [vmem:[#allocation2 + $0xc] sm:$0xf]
    %v663 = vld [vmem:[#allocation2 + $0x20] sm:$0xf]
    %v664 = vld [vmem:[#allocation2 + $0x34] sm:$0xf]
    %v665 = vld [vmem:[#allocation2 + $0x48] sm:$0xf]
    %v666 = vld [vmem:[%s2 + $0x3] sm:$0x1]
    %v668 = vlaneseq
    %v669 = vshrl.u32 %v668, 7
    %v670 = vsub.s32 0, %v669
    %v671 = vrot.slane %v666, %v670
    %v677 = vunpack.c.l.b16 %v662
    %v678 = vunpack.c.l.b16 %v663
    %v679 = vunpack.c.l.b16 %v664
    %v680 = vunpack.c.l.b16 %v665
    %v681 = vpack.c.b16 %v678, %v677
    %v682 = vpack.c.b16 %v680, %v679
    %685 = vmatprep.subr.bf16.mxu0 0
    %686 = vmatpush1.bf16.msra.mxu0 %v681
    %687 = vmatprep.subr.bf16.mxu0 0
    %688 = vmatpush1.bf16.msra.mxu0 %v682
    %689 = vmatprep.subr.bf16.mxu0 0
    %690 = vmatpush1.bf16.msra.mxu0 0
    %691 = vmatprep.subr.bf16.mxu0 0
    %692 = vmatpush1.bf16.msra.mxu0 0
    %693 = vmatprep.subr.bf16.mxu0 0
    %694 = vmatpush1.bf16.msra.mxu0 0
    %695 = vmatprep.subr.bf16.mxu0 0
    %696 = vmatpush1.bf16.msra.mxu0 0
    %697 = vmatprep.subr.bf16.mxu0 0
    %698 = vmatpush1.bf16.msra.mxu0 0
    %699 = vmatprep.subr.bf16.mxu0 0
    %700 = vmatpush1.bf16.msra.mxu0 0
    %701 = vmatprep.subr.bf16.mxu0 0
    %702 = vmatpush1.bf16.msra.mxu0 0
    %703 = vmatprep.subr.bf16.mxu0 0
    %704 = vmatpush1.bf16.msra.mxu0 0
    %705 = vmatprep.subr.bf16.mxu0 0
    %706 = vmatpush1.bf16.msra.mxu0 0
    %707 = vmatprep.subr.bf16.mxu0 0
    %708 = vmatpush1.bf16.msra.mxu0 0
    %709 = vmatprep.subr.bf16.mxu0 0
    %710 = vmatpush1.bf16.msra.mxu0 0
    %711 = vmatprep.subr.bf16.mxu0 0
    %712 = vmatpush1.bf16.msra.mxu0 0
    %713 = vmatprep.subr.bf16.mxu0 0
    %714 = vmatpush1.bf16.msra.mxu0 0
    %715 = vmatprep.subr.bf16.mxu0 0
    %716 = vmatpush1.bf16.msra.mxu0 0
    %717 = vmatprep.mubr.bf16.mxu0 0
    %718 = vmatmul.mubr.bf16.gmra.mrb[0].mxu0 %v75
    %v719 = vpop.f32.mrb[0].mxu0
    %v720 = vadd.f32 %v671, %v719
    %v721 = vpop.f32.mrb[0].mxu0
    %v722 = vpop.f32.mrb[0].mxu0
    %v723 = vpop.f32.mrb[0].mxu0
    %724 = vdwg.mxu0
    %v725 = vmax.f32 %v720, 0.0
    %v726 = vpack.c.bf16 %v725, %v725
    %v727 = vld [vmem:[#allocation4 + $0x180] sm:$0xff]
    %v728 = vld [vmem:[#allocation4 + $0x188] sm:$0xff]
    %v729 = vld [vmem:[#allocation4 + $0x190] sm:$0xff]
    %v730 = vld [vmem:[#allocation4 + $0x198] sm:$0xff]
    %v731 = vld [vmem:[#allocation4 + $0x1a0] sm:$0xff]
    %v732 = vld [vmem:[#allocation4 + $0x1a8] sm:$0xff]
    %v733 = vld [vmem:[#allocation4 + $0x1b0] sm:$0xff]
    %v734 = vld [vmem:[#allocation4 + $0x1b8] sm:$0xff]
    %v735 = vld [vmem:[#allocation4 + $0x1c0] sm:$0xff]
    %v736 = vld [vmem:[#allocation4 + $0x1c8] sm:$0xff]
    %v737 = vld [vmem:[#allocation4 + $0x1d0] sm:$0xff]
    %v738 = vld [vmem:[#allocation4 + $0x1d8] sm:$0xff]
    %v739 = vld [vmem:[#allocation4 + $0x1e0] sm:$0xff]
    %v740 = vld [vmem:[#allocation4 + $0x1e8] sm:$0xff]
    %v741 = vld [vmem:[#allocation4 + $0x1f0] sm:$0xff]
    %v742 = vld [vmem:[#allocation4 + $0x1f8] sm:$0xff]
    %v759 = vunpack.c.l.b16 %v727
    %v760 = vunpack.c.h.b16 %v727
    %v761 = vunpack.c.l.b16 %v728
    %v762 = vunpack.c.h.b16 %v728
    %v763 = vunpack.c.l.b16 %v729
    %v764 = vunpack.c.h.b16 %v729
    %v765 = vunpack.c.l.b16 %v730
    %v766 = vunpack.c.h.b16 %v730
    %v767 = vunpack.c.l.b16 %v731
    %v768 = vunpack.c.h.b16 %v731
    %v769 = vunpack.c.l.b16 %v732
    %v770 = vunpack.c.h.b16 %v732
    %v771 = vunpack.c.l.b16 %v733
    %v772 = vunpack.c.h.b16 %v733
    %v773 = vunpack.c.l.b16 %v734
    %v774 = vunpack.c.h.b16 %v734
    %v775 = vunpack.c.l.b16 %v735
    %v776 = vunpack.c.h.b16 %v735
    %v777 = vunpack.c.l.b16 %v736
    %v778 = vunpack.c.h.b16 %v736
    %v779 = vunpack.c.l.b16 %v737
    %v780 = vunpack.c.h.b16 %v737
    %v781 = vunpack.c.l.b16 %v738
    %v782 = vunpack.c.h.b16 %v738
    %v783 = vunpack.c.l.b16 %v739
    %v784 = vunpack.c.h.b16 %v739
    %v785 = vunpack.c.l.b16 %v740
    %v786 = vunpack.c.h.b16 %v740
    %v787 = vunpack.c.l.b16 %v741
    %v788 = vunpack.c.h.b16 %v741
    %v789 = vunpack.c.l.b16 %v742
    %v790 = vunpack.c.h.b16 %v742
    %v791 = vpack.c.b16 %v761, %v759
    %v792 = vpack.c.b16 %v762, %v760
    %v793 = vpack.c.b16 %v765, %v763
    %v794 = vpack.c.b16 %v766, %v764
    %v795 = vpack.c.b16 %v769, %v767
    %v796 = vpack.c.b16 %v770, %v768
    %v797 = vpack.c.b16 %v773, %v771
    %v798 = vpack.c.b16 %v774, %v772
    %v799 = vpack.c.b16 %v777, %v775
    %v800 = vpack.c.b16 %v778, %v776
    %v801 = vpack.c.b16 %v781, %v779
    %v802 = vpack.c.b16 %v782, %v780
    %v803 = vpack.c.b16 %v785, %v783
    %v804 = vpack.c.b16 %v786, %v784
    %v805 = vpack.c.b16 %v789, %v787
    %v806 = vpack.c.b16 %v790, %v788
    %823 = vmatprep.subr.bf16.mxu0 %v792
    %824 = vmatpush1.bf16.msra.mxu0 %v791
    %825 = vmatprep.subr.bf16.mxu0 %v794
    %826 = vmatpush1.bf16.msra.mxu0 %v793
    %827 = vmatprep.subr.bf16.mxu0 %v796
    %828 = vmatpush1.bf16.msra.mxu0 %v795
    %829 = vmatprep.subr.bf16.mxu0 %v798
    %830 = vmatpush1.bf16.msra.mxu0 %v797
    %831 = vmatprep.subr.bf16.mxu0 %v800
    %832 = vmatpush1.bf16.msra.mxu0 %v799
    %833 = vmatprep.subr.bf16.mxu0 %v802
    %834 = vmatpush1.bf16.msra.mxu0 %v801
    %835 = vmatprep.subr.bf16.mxu0 %v804
    %836 = vmatpush1.bf16.msra.mxu0 %v803
    %837 = vmatprep.subr.bf16.mxu0 %v806
    %838 = vmatpush1.bf16.msra.mxu0 %v805
    %839 = vmatprep.subr.bf16.mxu0 0
    %840 = vmatpush1.bf16.msra.mxu0 0
    %841 = vmatprep.subr.bf16.mxu0 0
    %842 = vmatpush1.bf16.msra.mxu0 0
    %843 = vmatprep.subr.bf16.mxu0 0
    %844 = vmatpush1.bf16.msra.mxu0 0
    %845 = vmatprep.subr.bf16.mxu0 0
    %846 = vmatpush1.bf16.msra.mxu0 0
    %847 = vmatprep.subr.bf16.mxu0 0
    %848 = vmatpush1.bf16.msra.mxu0 0
    %849 = vmatprep.subr.bf16.mxu0 0
    %850 = vmatpush1.bf16.msra.mxu0 0
    %851 = vmatprep.subr.bf16.mxu0 0
    %852 = vmatpush1.bf16.msra.mxu0 0
    %853 = vmatprep.subr.bf16.mxu0 0
    %854 = vmatpush1.bf16.msra.mxu0 0
    %855 = vmatprep.mubr.bf16.mxu0 0
    %856 = vmatmul.mubr.bf16.gmra.mrb[0].mxu0 %v726
    %v857 = vpop.f32.mrb[0].mxu0
    %v858 = vadd.f32 0.0, %v857
    %v859 = vpop.f32.mrb[0].mxu0
    %v860 = vadd.f32 0.0, %v859
    %v861 = vpop.f32.mrb[0].mxu0
    %v862 = vpop.f32.mrb[0].mxu0
    %863 = vdwg.mxu0
    %v864 = vadd.f32 %v660, %v858
    %v865 = vadd.f32 %v661, %v860
    %v866 = vld [vmem:[#allocation2 + $0x10] sm:$0xf]
    %v867 = vld [vmem:[#allocation2 + $0x24] sm:$0xf]
    %v868 = vld [vmem:[#allocation2 + $0x38] sm:$0xf]
    %v869 = vld [vmem:[#allocation2 + $0x4c] sm:$0xf]
    %v870 = vld [vmem:[%s2 + $0x4] sm:$0x1]
    %v872 = vlaneseq
    %v873 = vshrl.u32 %v872, 7
    %v874 = vsub.s32 0, %v873
    %v875 = vrot.slane %v870, %v874
    %v881 = vunpack.c.l.b16 %v866
    %v882 = vunpack.c.l.b16 %v867
    %v883 = vunpack.c.l.b16 %v868
    %v884 = vunpack.c.l.b16 %v869
    %v885 = vpack.c.b16 %v882, %v881
    %v886 = vpack.c.b16 %v884, %v883
    %889 = vmatprep.subr.bf16.mxu0 0
    %890 = vmatpush1.bf16.msra.mxu0 %v885
    %891 = vmatprep.subr.bf16.mxu0 0
    %892 = vmatpush1.bf16.msra.mxu0 %v886
    %893 = vmatprep.subr.bf16.mxu0 0
    %894 = vmatpush1.bf16.msra.mxu0 0
    %895 = vmatprep.subr.bf16.mxu0 0
    %896 = vmatpush1.bf16.msra.mxu0 0
    %897 = vmatprep.subr.bf16.mxu0 0
    %898 = vmatpush1.bf16.msra.mxu0 0
    %899 = vmatprep.subr.bf16.mxu0 0
    %900 = vmatpush1.bf16.msra.mxu0 0
    %901 = vmatprep.subr.bf16.mxu0 0
    %902 = vmatpush1.bf16.msra.mxu0 0
    %903 = vmatprep.subr.bf16.mxu0 0
    %904 = vmatpush1.bf16.msra.mxu0 0
    %905 = vmatprep.subr.bf16.mxu0 0
    %906 = vmatpush1.bf16.msra.mxu0 0
    %907 = vmatprep.subr.bf16.mxu0 0
    %908 = vmatpush1.bf16.msra.mxu0 0
    %909 = vmatprep.subr.bf16.mxu0 0
    %910 = vmatpush1.bf16.msra.mxu0 0
    %911 = vmatprep.subr.bf16.mxu0 0
    %912 = vmatpush1.bf16.msra.mxu0 0
    %913 = vmatprep.subr.bf16.mxu0 0
    %914 = vmatpush1.bf16.msra.mxu0 0
    %915 = vmatprep.subr.bf16.mxu0 0
    %916 = vmatpush1.bf16.msra.mxu0 0
    %917 = vmatprep.subr.bf16.mxu0 0
    %918 = vmatpush1.bf16.msra.mxu0 0
    %919 = vmatprep.subr.bf16.mxu0 0
    %920 = vmatpush1.bf16.msra.mxu0 0
    %921 = vmatprep.mubr.bf16.mxu0 0
    %922 = vmatmul.mubr.bf16.gmra.mrb[0].mxu0 %v75
    %v923 = vpop.f32.mrb[0].mxu0
    %v924 = vadd.f32 %v875, %v923
    %v925 = vpop.f32.mrb[0].mxu0
    %v926 = vpop.f32.mrb[0].mxu0
    %v927 = vpop.f32.mrb[0].mxu0
    %928 = vdwg.mxu0
    %v929 = vmax.f32 %v924, 0.0
    %v930 = vpack.c.bf16 %v929, %v929
    %v931 = vld [vmem:[#allocation4 + $0x200] sm:$0xff]
    %v932 = vld [vmem:[#allocation4 + $0x208] sm:$0xff]
    %v933 = vld [vmem:[#allocation4 + $0x210] sm:$0xff]
    %v934 = vld [vmem:[#allocation4 + $0x218] sm:$0xff]
    %v935 = vld [vmem:[#allocation4 + $0x220] sm:$0xff]
    %v936 = vld [vmem:[#allocation4 + $0x228] sm:$0xff]
    %v937 = vld [vmem:[#allocation4 + $0x230] sm:$0xff]
    %v938 = vld [vmem:[#allocation4 + $0x238] sm:$0xff]
    %v939 = vld [vmem:[#allocation4 + $0x240] sm:$0xff]
    %v940 = vld [vmem:[#allocation4 + $0x248] sm:$0xff]
    %v941 = vld [vmem:[#allocation4 + $0x250] sm:$0xff]
    %v942 = vld [vmem:[#allocation4 + $0x258] sm:$0xff]
    %v943 = vld [vmem:[#allocation4 + $0x260] sm:$0xff]
    %v944 = vld [vmem:[#allocation4 + $0x268] sm:$0xff]
    %v945 = vld [vmem:[#allocation4 + $0x270] sm:$0xff]
    %v946 = vld [vmem:[#allocation4 + $0x278] sm:$0xff]
    %v963 = vunpack.c.l.b16 %v931
    %v964 = vunpack.c.h.b16 %v931
    %v965 = vunpack.c.l.b16 %v932
    %v966 = vunpack.c.h.b16 %v932
    %v967 = vunpack.c.l.b16 %v933
    %v968 = vunpack.c.h.b16 %v933
    %v969 = vunpack.c.l.b16 %v934
    %v970 = vunpack.c.h.b16 %v934
    %v971 = vunpack.c.l.b16 %v935
    %v972 = vunpack.c.h.b16 %v935
    %v973 = vunpack.c.l.b16 %v936
    %v974 = vunpack.c.h.b16 %v936
    %v975 = vunpack.c.l.b16 %v937
    %v976 = vunpack.c.h.b16 %v937
    %v977 = vunpack.c.l.b16 %v938
    %v978 = vunpack.c.h.b16 %v938
    %v979 = vunpack.c.l.b16 %v939
    %v980 = vunpack.c.h.b16 %v939
    %v981 = vunpack.c.l.b16 %v940
    %v982 = vunpack.c.h.b16 %v940
    %v983 = vunpack.c.l.b16 %v941
    %v984 = vunpack.c.h.b16 %v941
    %v985 = vunpack.c.l.b16 %v942
    %v986 = vunpack.c.h.b16 %v942
    %v987 = vunpack.c.l.b16 %v943
    %v988 = vunpack.c.h.b16 %v943
    %v989 = vunpack.c.l.b16 %v944
    %v990 = vunpack.c.h.b16 %v944
    %v991 = vunpack.c.l.b16 %v945
    %v992 = vunpack.c.h.b16 %v945
    %v993 = vunpack.c.l.b16 %v946
    %v994 = vunpack.c.h.b16 %v946
    %v995 = vpack.c.b16 %v965, %v963
    %v996 = vpack.c.b16 %v966, %v964
    %v997 = vpack.c.b16 %v969, %v967
    %v998 = vpack.c.b16 %v970, %v968
    %v999 = vpack.c.b16 %v973, %v971
    %v1000 = vpack.c.b16 %v974, %v972
    %v1001 = vpack.c.b16 %v977, %v975
    %v1002 = vpack.c.b16 %v978, %v976
    %v1003 = vpack.c.b16 %v981, %v979
    %v1004 = vpack.c.b16 %v982, %v980
    %v1005 = vpack.c.b16 %v985, %v983
    %v1006 = vpack.c.b16 %v986, %v984
    %v1007 = vpack.c.b16 %v989, %v987
    %v1008 = vpack.c.b16 %v990, %v988
    %v1009 = vpack.c.b16 %v993, %v991
    %v1010 = vpack.c.b16 %v994, %v992
    %1027 = vmatprep.subr.bf16.mxu0 %v996
    %1028 = vmatpush1.bf16.msra.mxu0 %v995
    %1029 = vmatprep.subr.bf16.mxu0 %v998
    %1030 = vmatpush1.bf16.msra.mxu0 %v997
    %1031 = vmatprep.subr.bf16.mxu0 %v1000
    %1032 = vmatpush1.bf16.msra.mxu0 %v999
    %1033 = vmatprep.subr.bf16.mxu0 %v1002
    %1034 = vmatpush1.bf16.msra.mxu0 %v1001
    %1035 = vmatprep.subr.bf16.mxu0 %v1004
    %1036 = vmatpush1.bf16.msra.mxu0 %v1003
    %1037 = vmatprep.subr.bf16.mxu0 %v1006
    %1038 = vmatpush1.bf16.msra.mxu0 %v1005
    %1039 = vmatprep.subr.bf16.mxu0 %v1008
    %1040 = vmatpush1.bf16.msra.mxu0 %v1007
    %1041 = vmatprep.subr.bf16.mxu0 %v1010
    %1042 = vmatpush1.bf16.msra.mxu0 %v1009
    %1043 = vmatprep.subr.bf16.mxu0 0
    %1044 = vmatpush1.bf16.msra.mxu0 0
    %1045 = vmatprep.subr.bf16.mxu0 0
    %1046 = vmatpush1.bf16.msra.mxu0 0
    %1047 = vmatprep.subr.bf16.mxu0 0
    %1048 = vmatpush1.bf16.msra.mxu0 0
    %1049 = vmatprep.subr.bf16.mxu0 0
    %1050 = vmatpush1.bf16.msra.mxu0 0
    %1051 = vmatprep.subr.bf16.mxu0 0
    %1052 = vmatpush1.bf16.msra.mxu0 0
    %1053 = vmatprep.subr.bf16.mxu0 0
    %1054 = vmatpush1.bf16.msra.mxu0 0
    %1055 = vmatprep.subr.bf16.mxu0 0
    %1056 = vmatpush1.bf16.msra.mxu0 0
    %1057 = vmatprep.subr.bf16.mxu0 0
    %1058 = vmatpush1.bf16.msra.mxu0 0
    %1059 = vmatprep.mubr.bf16.mxu0 0
    %1060 = vmatmul.mubr.bf16.gmra.mrb[0].mxu0 %v930
    %v1061 = vpop.f32.mrb[0].mxu0
    %v1062 = vadd.f32 0.0, %v1061
    %v1063 = vpop.f32.mrb[0].mxu0
    %v1064 = vadd.f32 0.0, %v1063
    %v1065 = vpop.f32.mrb[0].mxu0
    %v1066 = vpop.f32.mrb[0].mxu0
    %1067 = vdwg.mxu0
    %v1068 = vadd.f32 %v864, %v1062
    %v1069 = vadd.f32 %v865, %v1064
    %v1070 = vld [vmem:[%s4] sm:$0x3]
    %v1072 = vlaneseq
    %v1073 = vshrl.u32 %v1072, 7
    %v1074 = vsub.s32 0, %v1073
    %v1075 = vrot.slane %v1070, %v1074
    %v1076 = vlaneseq
    %v1077 = vshrl.u32 %v1076, 7
    %v1078 = vsub.s32 1, %v1077
    %v1079 = vrot.slane %v1070, %v1078
    %v1082 = vadd.f32 %v1068, %v1075
    %v1083 = vadd.f32 %v1069, %v1079
    %v1084 = vmax.f32 %v1082, 0.0
    %v1085 = vmax.f32 %v1083, 0.0
    %1086 = vst [vmem:[%s5] sm:$0xff] %v1084
    %1087 = vst [vmem:[%s5 + $0x8] sm:$0xff] %v1085
    // Predicated region
    $region30: #{qnetwork_forward.1} parent=1 // pred_check
      _
    $region31: #{qnetwork_forward.1} parent=1 // pred_check_branch
      %1089 = sbr.rel (0) target = $region33
    $region32: #{qnetwork_forward.1} parent=1 // pred_region
      _
    $region33: #{qnetwork_forward.1} parent=1 // pred_fallthru
      _
    // Predicated region
    $region34: #{qnetwork_forward.1} parent=1 // pred_check
      _
    $region35: #{qnetwork_forward.1} parent=1 // pred_check_branch
      %1091 = sbr.rel (0) target = $region37
    $region36: #{qnetwork_forward.1} parent=1 // pred_region
      _
    $region37: #{qnetwork_forward.1} parent=1 // pred_fallthru
      _
    %1092 = vsyncpa [#allocation3], 1
    %1093 = vsyncpa [#allocation5], 1

</llo_original>
